<compile_context>
chip_gen: v6e
topology: v6e:2x2x1
jax: 0.10.0
libtpu: 0.0.40
codegen_flags: <defaults>
</compile_context>

<pallas_src>
import functools

import numpy as np
import jax
import jax.numpy as jnp
from jax.experimental import pallas as pl
from jax.experimental.pallas import tpu as pltpu


def _interp_matrix(in_size: int, out_size: int):
    """W (f32) such that x @ W == F.interpolate(x, size=out_size, mode='linear', align_corners=True)."""
    W = np.zeros((in_size, out_size), dtype=np.float32)
    if in_size == out_size:
        np.fill_diagonal(W, 1.0)
    elif out_size == 1:
        W[0, 0] = 1.0
    elif in_size == 1:
        W[0, :] = 1.0
    else:
        scale = (in_size - 1) / (out_size - 1)
        for j in range(out_size):
            pos = j * scale
            i0 = min(int(np.floor(pos)), in_size - 1)
            i1 = min(i0 + 1, in_size - 1)
            frac = pos - i0
            W[i0, j] += 1.0 - frac
            W[i1, j] += frac
    return jnp.asarray(W, dtype=jnp.float32)


def _resample_norm_kernel(x_ref, w_ref, gb_ref, o_ref, *, out_size: int):
    # x_ref: (TM, In)       input rows (source dtype, fed straight to the MXU)
    # w_ref: (In, OutP)     gate-folded, lane-padded interpolation matrix (source dtype)
    # gb_ref: (2, OutP) f32 packed [gamma; beta], zero in padded lanes
    # o_ref: (TM, OutP)     lane-dense output (padded columns written as 0, sliced off outside)

    # Resample (+ folded gate) on the MXU; f32 accumulate via preferred_element_type,
    # no up-cast of the inputs.
    y = jnp.dot(x_ref[...], w_ref[...], preferred_element_type=jnp.float32)  # (TM, OutP) f32

    # Single-pass LayerNorm statistics over the TRUE feature width.  The padded columns of W
    # are exactly zero, so the padded columns of y are zero and the sums below are unaffected;
    # dividing by out_size (not the padded width) keeps mean/var correct.
    inv_n = jnp.float32(1.0 / out_size)
    s = jnp.sum(y, axis=-1, keepdims=True)
    s2 = jnp.sum(y * y, axis=-1, keepdims=True)
    mean = s * inv_n
    var = jnp.maximum(s2 * inv_n - mean * mean, 0.0)
    y = (y - mean) * jax.lax.rsqrt(var + 1e-5)

    gb = gb_ref[...].astype(jnp.float32)
    gamma = gb[0:1, :]
    beta = gb[1:2, :]
    # gamma/beta are zero in the padded lanes, so padded output columns store 0.
    o_ref[...] = (y * gamma + beta).astype(o_ref.dtype)


def _choose_tile_m(M: int, in_size: int, out_p: int, itemsize: int) -> int:
    """Largest multiple-of-8 row tile that keeps the double-buffered slabs well under VMEM."""
    if M % 8 != 0:
        return M  # full-extent block (still legal when not divisible by 8)
    budget = 8 * 1024 * 1024  # bytes for per-tile I/O slabs + f32 intermediate
    per_row = 2 * (in_size + out_p) * itemsize + out_p * 4
    tm = budget // max(per_row, 1)
    tm = (tm // 8) * 8
    tm = max(8, min(M, tm, 2048))  # cap re-derived for the 64 MiB-VMEM parts (v7x)
    return tm


def resample_norm(x, mask, gamma, beta, output_size: int, *, pad_output_lanes: bool = True):
    """ResampleNorm forward: x (B, S, input_size) -> (B, S, output_size)."""
    B, S, in_size = x.shape
    M = B * S
    x2 = x.reshape(M, in_size)

    out_p = output_size
    if pad_output_lanes and output_size % 128 != 0:
        out_p = ((output_size + 127) // 128) * 128

    # Fold the trainable gate (sigmoid(mask) * 2, a per-output-column scale applied before the
    # LayerNorm) into the interpolation matrix once, outside the kernel.
    W = _interp_matrix(in_size, output_size)                       # (In, Out) f32
    gate = jax.nn.sigmoid(mask.astype(jnp.float32)) * 2.0          # (Out,)
    Wg = W * gate[None, :]
    if out_p != output_size:
        Wg = jnp.pad(Wg, ((0, 0), (0, out_p - output_size)))
    Wg = Wg.astype(x.dtype)

    # Pack gamma/beta into a single (2, OutP) parameter block (one DMA, padded lanes = 0).
    gb = jnp.zeros((2, out_p), jnp.float32)
    gb = gb.at[0, :output_size].set(gamma.astype(jnp.float32))
    gb = gb.at[1, :output_size].set(beta.astype(jnp.float32))

    itemsize = jnp.dtype(x.dtype).itemsize
    tm = _choose_tile_m(M, in_size, out_p, itemsize)
    grid = (pl.cdiv(M, tm),)

    # Explicit VMEM budget: double-buffered x/out tiles + f32 intermediate + params, with headroom.
    tile_bytes = 2 * tm * (in_size + out_p) * itemsize + tm * out_p * 4
    param_bytes = in_size * out_p * itemsize + 2 * out_p * 4
    vmem_limit = int(min(32 * 2**20, max(16 * 2**20, 2 * (tile_bytes + param_bytes))))

    cost = pl.CostEstimate(
        flops=2 * M * in_size * out_p,
        transcendentals=0,
        bytes_accessed=M * in_size * itemsize + M * out_p * itemsize + param_bytes,
    )

    out = pl.pallas_call(
        functools.partial(_resample_norm_kernel, out_size=output_size),
        out_shape=jax.ShapeDtypeStruct((M, out_p), x.dtype),
        grid=grid,
        in_specs=[
            pl.BlockSpec((tm, in_size), lambda i: (i, 0)),
            pl.BlockSpec((in_size, out_p), lambda i: (0, 0)),
            pl.BlockSpec((2, out_p), lambda i: (0, 0)),
        ],
        out_specs=pl.BlockSpec((tm, out_p), lambda i: (i, 0)),
        compiler_params=pltpu.CompilerParams(
            dimension_semantics=("parallel",),  # rows are independent; shards across TCs on v7x
            vmem_limit_bytes=vmem_limit,
        ),
        cost_estimate=cost,
    )(x2, Wg, gb)

    if out_p != output_size:
        out = out[:, :output_size]
    return out.reshape(B, S, output_size)


def variable_selection_network(x: dict, params: dict, hidden_size: int):
    """VariableSelectionNetwork.forward for the num_inputs == 1, embedding-flagged configuration:
    the single_variable_grn is ResampleNorm(input_size, hidden_size) and there is no prescaler.
    Returns (outputs, sparse_weights) exactly like the PyTorch module.
    """
    # TODO(synk): the multi-input path (per-variable GatedResidualNetworks, flattened GRN and
    # softmax variable weighting) is not fused into Pallas here; only the single-input
    # ResampleNorm configuration is implemented.
    name = next(iter(x.keys()))
    emb = x[name]
    p = params[name]
    outputs = resample_norm(emb, p["mask"], p["gamma"], p["beta"], hidden_size)
    sparse_weights = jnp.ones((outputs.shape[0], 1, 1), dtype=outputs.dtype)
    return outputs, sparse_weights


def _reference(x, mask, gamma, beta, output_size):
    # Pure-JAX reference replicating the PyTorch ResampleNorm forward (unfused).
    W = _interp_matrix(x.shape[-1], output_size)
    y = jnp.einsum("bsi,io->bso", x.astype(jnp.float32), W)
    y = y * (jax.nn.sigmoid(mask) * 2.0)
    mean = jnp.mean(y, axis=-1, keepdims=True)
    var = jnp.mean((y - mean) ** 2, axis=-1, keepdims=True)
    y = (y - mean) / jnp.sqrt(var + 1e-5)
    return y * gamma + beta


if __name__ == "__main__":
    key = jax.random.PRNGKey(0)
    B, S = 2, 8
    input_size, hidden_size = 32, 64

    x = jax.random.normal(key, (B, S, input_size), dtype=jnp.float32)

    # Deterministic module parameters:
    #   ResampleNorm.mask = zeros(hidden_size); nn.LayerNorm -> weight = ones, bias = zeros
    mask = jnp.zeros((hidden_size,), dtype=jnp.float32)
    gamma = jnp.ones((hidden_size,), dtype=jnp.float32)
    beta = jnp.zeros((hidden_size,), dtype=jnp.float32)

    inputs = {"embedded_var": x}
    params = {"embedded_var": {"mask": mask, "gamma": gamma, "beta": beta}}

    outputs, sparse_weights = variable_selection_network(inputs, params, hidden_size)
    outputs = jax.block_until_ready(outputs)
    sparse_weights = jax.block_until_ready(sparse_weights)

    ref = _reference(x, mask, gamma, beta, hidden_size)
    assert outputs.shape == (B, S, hidden_size)
    assert sparse_weights.shape == (B, 1, 1)
    np.testing.assert_allclose(np.asarray(outputs), np.asarray(ref), atol=1e-4, rtol=1e-4)
    np.testing.assert_allclose(np.asarray(sparse_weights), np.ones((B, 1, 1), np.float32))

    print("KERNEL_OK")
</pallas_src>

<mosaic_0001>
module attributes {stable_mosaic.version = 11 : i64} {
  func.func @_resample_norm_kernel(%arg0: i32, %arg1: memref<16x32xf32, #tpu.memory_space<vmem>>, %arg2: memref<32x128xf32, #tpu.memory_space<vmem>>, %arg3: memref<2x128xf32, #tpu.memory_space<vmem>>, %arg4: memref<16x128xf32, #tpu.memory_space<vmem>>) attributes {dimension_semantics = [#tpu.dimension_semantics<parallel>], iteration_bounds = array<i64: 1>, scalar_prefetch = 0 : i64, scratch_operands = 0 : i64, tpu.core_type = #tpu.core_type<tc>, window_params = [{transform_indices = @transform_0, window_bounds = array<i64: 16, 32>}, {pipeline_mode = #tpu.pipeline_mode<synchronous>, transform_indices = @transform_1, window_bounds = array<i64: 32, 128>}, {pipeline_mode = #tpu.pipeline_mode<synchronous>, transform_indices = @transform_2, window_bounds = array<i64: 2, 128>}, {transform_indices = @transform_3, window_bounds = array<i64: 16, 128>}]} {
    %c0 = arith.constant 0 : index
    %c0_0 = arith.constant 0 : index
    %0 = vector.load %arg1[%c0, %c0_0] : memref<16x32xf32, #tpu.memory_space<vmem>>, vector<16x32xf32>
    %c0_1 = arith.constant 0 : index
    %c0_2 = arith.constant 0 : index
    %1 = vector.load %arg2[%c0_1, %c0_2] : memref<32x128xf32, #tpu.memory_space<vmem>>, vector<32x128xf32>
    %cst = arith.constant dense<0.000000e+00> : vector<16x128xf32>
    %2 = tpu.matmul %0, %1, %cst {dimension_numbers = #tpu.dot_dimension_numbers<[1], [0], [0], [1], [0, 0, 1, 1], [], []>} : vector<16x32xf32>, vector<32x128xf32>, vector<16x128xf32> -> vector<16x128xf32>
    %cst_3 = arith.constant dense<0.000000e+00> : vector<16xf32>
    %3 = vector.multi_reduction <add>, %2, %cst_3 [1] : vector<16x128xf32> to vector<16xf32>
    %4 = vector.shape_cast %3 : vector<16xf32> to vector<16x1xf32>
    %5 = arith.mulf %2, %2 : vector<16x128xf32>
    %cst_4 = arith.constant dense<0.000000e+00> : vector<16xf32>
    %6 = vector.multi_reduction <add>, %5, %cst_4 [1] : vector<16x128xf32> to vector<16xf32>
    %7 = vector.shape_cast %6 : vector<16xf32> to vector<16x1xf32>
    %cst_5 = arith.constant 1.562500e-02 : f32
    %8 = vector.broadcast %cst_5 : f32 to vector<16x1xf32>
    %9 = arith.mulf %4, %8 : vector<16x1xf32>
    %cst_6 = arith.constant 1.562500e-02 : f32
    %10 = vector.broadcast %cst_6 : f32 to vector<16x1xf32>
    %11 = arith.mulf %7, %10 : vector<16x1xf32>
    %12 = arith.mulf %9, %9 : vector<16x1xf32>
    %13 = arith.subf %11, %12 : vector<16x1xf32>
    %cst_7 = arith.constant 0.000000e+00 : f32
    %14 = vector.broadcast %cst_7 : f32 to vector<16x1xf32>
    %15 = arith.maximumf %13, %14 : vector<16x1xf32>
    %16 = vector.broadcast %9 : vector<16x1xf32> to vector<16x128xf32>
    %17 = arith.subf %2, %16 : vector<16x128xf32>
    %cst_8 = arith.constant 9.99999974E-6 : f32
    %18 = vector.broadcast %cst_8 : f32 to vector<16x1xf32>
    %19 = arith.addf %15, %18 : vector<16x1xf32>
    %20 = math.rsqrt %19 : vector<16x1xf32>
    %21 = vector.broadcast %20 : vector<16x1xf32> to vector<16x128xf32>
    %22 = arith.mulf %17, %21 : vector<16x128xf32>
    %c0_9 = arith.constant 0 : index
    %c0_10 = arith.constant 0 : index
    %23 = vector.load %arg3[%c0_9, %c0_10] : memref<2x128xf32, #tpu.memory_space<vmem>>, vector<2x128xf32>
    %24 = vector.extract_strided_slice %23 {offsets = [0, 0], sizes = [1, 128], strides = [1, 1]} : vector<2x128xf32> to vector<1x128xf32>
    %25 = vector.extract_strided_slice %23 {offsets = [1, 0], sizes = [1, 128], strides = [1, 1]} : vector<2x128xf32> to vector<1x128xf32>
    %26 = vector.broadcast %24 : vector<1x128xf32> to vector<16x128xf32>
    %27 = arith.mulf %22, %26 : vector<16x128xf32>
    %28 = vector.broadcast %25 : vector<1x128xf32> to vector<16x128xf32>
    %29 = arith.addf %27, %28 : vector<16x128xf32>
    %c0_11 = arith.constant 0 : index
    %c0_12 = arith.constant 0 : index
    %30 = vector.load %arg4[%c0_11, %c0_12] : memref<16x128xf32, #tpu.memory_space<vmem>>, vector<16x128xf32>
    tpu.vector_store %arg4[%c0_11, %c0_12], %29 {strides = array<i32>} : memref<16x128xf32, #tpu.memory_space<vmem>>, vector<16x128xf32>,
    return
  }
  func.func @transform_0(%arg0: i32) -> (i32, i32) {
    %c0_i32 = arith.constant 0 : i32
    %c0_i32_0 = arith.constant 0 : i32
    return %arg0, %c0_i32 : i32, i32
  }
  func.func @transform_1(%arg0: i32) -> (i32, i32) {
    %c0_i32 = arith.constant 0 : i32
    %c0_i32_0 = arith.constant 0 : i32
    %c0_i32_1 = arith.constant 0 : i32
    return %c0_i32, %c0_i32_0 : i32, i32
  }
  func.func @transform_2(%arg0: i32) -> (i32, i32) {
    %c0_i32 = arith.constant 0 : i32
    %c0_i32_0 = arith.constant 0 : i32
    %c0_i32_1 = arith.constant 0 : i32
    return %c0_i32, %c0_i32_0 : i32, i32
  }
  func.func @transform_3(%arg0: i32) -> (i32, i32) {
    %c0_i32 = arith.constant 0 : i32
    %c0_i32_0 = arith.constant 0 : i32
    return %arg0, %c0_i32 : i32, i32
  }
}

</mosaic_0001>

<llo_original>
// kernel: tpu_custom_call.1
$region0: #{tpu_custom_call.1}
  #allocation0 [shape = 'u32[]', space=smem, size = 0x4, offset = 0x4, fixed_abs, tag = 'smem constant byte address 0x4 - core index']
  #allocation1 [shape = 'u32[144,128]{1,0:T(1,128)}', space=vmem, size = 0x12000, scoped, tag = 'internal scratch']
  %s0 = inlined_call_operand.hbm [shape: f32[16,32], index: 0, kind: input, shape index: {}]
  %s1 = inlined_call_operand.hbm [shape: f32[32,128], index: 1, kind: input, shape index: {}]
  %s2 = inlined_call_operand.vmem [shape: f32[2,128], index: 2, kind: input, shape index: {}]
  %s3 = inlined_call_operand.hbm [shape: f32[16,128], index: 3, kind: output, shape index: {}]
  %s4 = sld [smem:[#allocation0]]
  $region30: #{tpu_custom_call.1} parent=0
    _
  %s6 = ssub.s32 1, %s4
  %s7 = scalar_select 0, %s6, %s4
  $region1: #{tpu_custom_call.1} parent=0
    #allocation2 [shape = 'u8[8192]{0}', space=vmem, size = 0x2000, scoped, tag = 'input window, operand 0, single buffered']
    #allocation3 [shape = 's32[1]{0}', space=sflag, size = 0x4, scoped, tag = 'scoped memory for tpu_custom_call.1']
    #allocation4 [shape = 's32[1]{0}', space=sflag, size = 0x4, scoped, tag = 'scoped memory for tpu_custom_call.1']
    #allocation5 [shape = 'u8[16384]{0}', space=vmem, size = 0x4000, scoped, tag = 'input window, operand 1, single buffered']
    #allocation6 [shape = 's32[1]{0}', space=sflag, size = 0x4, scoped, tag = 'scoped memory for tpu_custom_call.1']
    #allocation7 [shape = 'u8[8192]{0}', space=vmem, size = 0x2000, scoped, tag = 'output window, operand 0, single buffered']
    %8 = vsyncpa [#allocation3], 0
    %9 = vsyncpa [#allocation6], 0
    %10 = vsyncpa [#allocation4], 0
    // Predicated region
    $region2: #{tpu_custom_call.1} parent=1 // pred_check
      _
    $region3: #{tpu_custom_call.1} parent=1 // pred_check_branch
      %12 = sbr.rel (0) target = $region5
    $region4: #{tpu_custom_call.1} parent=1 // pred_region
      %s14 = ssub.s32 256, 256
      %15 = vsyncadd [#allocation3], %s14
      %s16 = sshll.u32 [#allocation2], 4
      %s17 = int_to_ptr.vmem [resolvable:$true] %s16
      %22 = dma.hbm_to_vmem [thread:$0]  %s0, 256, %s17, [#allocation3], 128, 128, 8
    $region5: #{tpu_custom_call.1} parent=1 // pred_fallthru
      _
    // Predicated region
    $region6: #{tpu_custom_call.1} parent=1 // pred_check
      _
    $region7: #{tpu_custom_call.1} parent=1 // pred_check_branch
      %24 = sbr.rel (0) target = $region9
    $region8: #{tpu_custom_call.1} parent=1 // pred_region
      %s26 = ssub.s32 512, 512
      %27 = vsyncadd [#allocation6], %s26
      %s28 = sshll.u32 [#allocation5], 4
      %s29 = int_to_ptr.vmem [resolvable:$true] %s28
      %34 = dma.hbm_to_vmem [thread:$0]  %s1, 512, %s29, [#allocation6], 128, 128, 8
    $region9: #{tpu_custom_call.1} parent=1 // pred_fallthru
      _
    // Predicated region
    $region10: #{tpu_custom_call.1} parent=1 // pred_check
      _
    $region11: #{tpu_custom_call.1} parent=1 // pred_check_branch
      %36 = sbr.rel (0) target = $region13
    $region12: #{tpu_custom_call.1} parent=1 // pred_region
      _
    $region13: #{tpu_custom_call.1} parent=1 // pred_fallthru
      _
    // Predicated region
    $region14: #{tpu_custom_call.1} parent=1 // pred_check
      _
    $region15: #{tpu_custom_call.1} parent=1 // pred_check_branch
      %38 = sbr.rel (0) target = $region17
    $region16: #{tpu_custom_call.1} parent=1 // pred_region
      %39 = dma.done [#allocation3], 256
    $region17: #{tpu_custom_call.1} parent=1 // pred_fallthru
      _
    // Predicated region
    $region18: #{tpu_custom_call.1} parent=1 // pred_check
      _
    $region19: #{tpu_custom_call.1} parent=1 // pred_check_branch
      %41 = sbr.rel (0) target = $region21
    $region20: #{tpu_custom_call.1} parent=1 // pred_region
      %42 = dma.done [#allocation6], 512
    $region21: #{tpu_custom_call.1} parent=1 // pred_fallthru
      _
    %v43 = vld [vmem:[#allocation2] sm:$0xff]
    %v44 = vld [vmem:[#allocation2 + $0x8] sm:$0xff]
    %v45 = vld [vmem:[#allocation5] sm:$0xff]
    %v46 = vld [vmem:[#allocation5 + $0x8] sm:$0xff]
    %v47 = vld [vmem:[#allocation5 + $0x10] sm:$0xff]
    %v48 = vld [vmem:[#allocation5 + $0x18] sm:$0xff]
    %vm49 = vcmask 261120
    %v51 = vsel %vm49, %v43, 0
    %v54 = vsel %vm49, %v44, 0
    %56 = vmatprep.subr.mxu0 0.0
    %57 = vmatpush1.msra.mxu0 0.0
    %58 = vmatprep.subr.mxu0 0.0
    %59 = vmatpush1.msra.mxu0 0.0
    %60 = vmatprep.subr.mxu0 0.0
    %61 = vmatpush1.msra.mxu0 0.0
    %62 = vmatprep.subr.mxu0 0.0
    %63 = vmatpush1.msra.mxu0 0.0
    %64 = vmatprep.subr.mxu0 0.0
    %65 = vmatpush1.msra.mxu0 0.0
    %66 = vmatprep.subr.mxu0 0.0
    %67 = vmatpush1.msra.mxu0 0.0
    %68 = vmatprep.subr.mxu0 0.0
    %69 = vmatpush1.msra.mxu0 0.0
    %70 = vmatprep.subr.mxu0 0.0
    %71 = vmatpush1.msra.mxu0 0.0
    %72 = vmatprep.subr.mxu0 0.0
    %73 = vmatpush1.msra.mxu0 0.0
    %74 = vmatprep.subr.mxu0 0.0
    %75 = vmatpush1.msra.mxu0 0.0
    %76 = vmatprep.subr.mxu0 0.0
    %77 = vmatpush1.msra.mxu0 0.0
    %78 = vmatprep.subr.mxu0 0.0
    %79 = vmatpush1.msra.mxu0 0.0
    %80 = vmatprep.subr.mxu0 0.0
    %81 = vmatpush1.msra.mxu0 %v48
    %82 = vmatprep.subr.mxu0 0.0
    %83 = vmatpush1.msra.mxu0 %v47
    %84 = vmatprep.subr.mxu0 0.0
    %85 = vmatpush1.msra.mxu0 %v46
    %86 = vmatprep.subr.mxu0 0.0
    %87 = vmatpush1.msra.mxu0 %v45
    %88 = vmatprep.subr.mxu0 0.0
    %89 = vmatpush2.msra.mxu0 0.0
    %90 = vmatprep.subr.mxu0 0.0
    %91 = vmatpush2.msra.mxu0 0.0
    %92 = vmatprep.subr.mxu0 0.0
    %93 = vmatpush2.msra.mxu0 0.0
    %94 = vmatprep.subr.mxu0 0.0
    %95 = vmatpush2.msra.mxu0 0.0
    %96 = vmatprep.subr.mxu0 0.0
    %97 = vmatpush2.msra.mxu0 0.0
    %98 = vmatprep.subr.mxu0 0.0
    %99 = vmatpush2.msra.mxu0 0.0
    %100 = vmatprep.subr.mxu0 0.0
    %101 = vmatpush2.msra.mxu0 0.0
    %102 = vmatprep.subr.mxu0 0.0
    %103 = vmatpush2.msra.mxu0 0.0
    %104 = vmatprep.subr.mxu0 0.0
    %105 = vmatpush2.msra.mxu0 0.0
    %106 = vmatprep.subr.mxu0 0.0
    %107 = vmatpush2.msra.mxu0 0.0
    %108 = vmatprep.subr.mxu0 0.0
    %109 = vmatpush2.msra.mxu0 0.0
    %110 = vmatprep.subr.mxu0 0.0
    %111 = vmatpush2.msra.mxu0 0.0
    %112 = vmatprep.subr.mxu0 0.0
    %113 = vmatpush2.msra.mxu0 0.0
    %114 = vmatprep.subr.mxu0 0.0
    %115 = vmatpush2.msra.mxu0 0.0
    %116 = vmatprep.subr.mxu0 0.0
    %117 = vmatpush2.msra.mxu0 0.0
    %118 = vmatprep.subr.mxu0 0.0
    %119 = vmatpush2.msra.mxu0 0.0
    %120 = vmatprep.mubr.f32.mxu0 0.0
    %121 = vmatmul.mubr.f32.gmra.mxu0 %v51
    %v122 = vpop.f32.mrf.mxu0
    %v123 = vadd.f32 0.0, %v122
    %v124 = vpop.f32.mrf.mxu0
    %125 = vmatprep.mubr.f32.mxu0 0.0
    %126 = vmatmul.mubr.f32.gmra.mxu0 %v54
    %v127 = vpop.f32.mrf.mxu0
    %v128 = vadd.f32 0.0, %v127
    %v129 = vpop.f32.mrf.mxu0
    %130 = vdwg.mxu0
    %131 = vadd.xlane.f32.xlu0 %v123
    %v132 = vpop.xlane.xlu0 %131
    %133 = vadd.xlane.f32.xlu0 %v128
    %v134 = vpop.xlane.xlu0 %133
    %v135 = vmul.f32 %v123, %v123
    %v136 = vmul.f32 %v128, %v128
    %137 = vadd.xlane.f32.xlu0 %v135
    %v138 = vpop.xlane.xlu0 %137
    %139 = vadd.xlane.f32.xlu0 %v136
    %v140 = vpop.xlane.xlu0 %139
    %v141 = vmul.f32 %v132, 0.015625
    %v142 = vmul.f32 %v134, 0.015625
    %v143 = vmul.f32 %v138, 0.015625
    %v144 = vmul.f32 %v140, 0.015625
    %v145 = vmul.f32 %v141, %v141
    %v146 = vmul.f32 %v142, %v142
    %v147 = vsub.f32 %v143, %v145
    %v148 = vsub.f32 %v144, %v146
    %v149 = vmax.f32 %v147, 0.0
    %v150 = vmax.f32 %v148, 0.0
    %v151 = vsub.f32 %v123, %v141
    %v152 = vsub.f32 %v128, %v142
    %v153 = vadd.f32 %v149, 1e-05
    %v154 = vadd.f32 %v150, 1e-05
    %v155 = vrsqrt.pop %v153
    %v156 = vrsqrt.pop %v154
    %v157 = vmul.f32 %v151, %v155
    %v158 = vmul.f32 %v152, %v156
    %v159 = vld [vmem:[%s2] sm:$0x3]
    %v160 = vlaneseq
    %v161 = vshrl.u32 %v160, 7
    %v162 = vsub.s32 0, %v161
    %v163 = vrot.slane %v159, %v162
    %v164 = vmul.f32 %v157, %v163
    %v165 = vmul.f32 %v158, %v163
    %v166 = vlaneseq
    %v167 = vshrl.u32 %v166, 7
    %v168 = vsub.s32 1, %v167
    %v169 = vrot.slane %v159, %v168
    %v170 = vadd.f32 %v164, %v169
    %v171 = vadd.f32 %v165, %v169
    %172 = vst [vmem:[#allocation7] sm:$0xff] %v170
    %173 = vst [vmem:[#allocation7 + $0x8] sm:$0xff] %v171
    // Predicated region
    $region22: #{tpu_custom_call.1} parent=1 // pred_check
      _
    $region23: #{tpu_custom_call.1} parent=1 // pred_check_branch
      %175 = sbr.rel (0) target = $region25
    $region24: #{tpu_custom_call.1} parent=1 // pred_region
      %s177 = ssub.s32 256, 256
      %178 = vsyncadd [#allocation4], %s177
      %s179 = sshll.u32 [#allocation7], 4
      %s180 = int_to_ptr.vmem [resolvable:$true] %s179
      %185 = dma.vmem_to_hbm [thread:$0]  %s180, 256, %s3, [#allocation4], 128, 128, 8
    $region25: #{tpu_custom_call.1} parent=1 // pred_fallthru
      _
    // Predicated region
    $region26: #{tpu_custom_call.1} parent=1 // pred_check
      _
    $region27: #{tpu_custom_call.1} parent=1 // pred_check_branch
      %187 = sbr.rel (0) target = $region29
    $region28: #{tpu_custom_call.1} parent=1 // pred_region
      %188 = dma.done [#allocation4], 256
    $region29: #{tpu_custom_call.1} parent=1 // pred_fallthru
      _
    %189 = vsyncpa [#allocation3], 1
    %190 = vsyncpa [#allocation6], 1
    %191 = vsyncpa [#allocation4], 1

</llo_original>
